<compile_context>
chip_gen: v6e
topology: v6e:2x2x1
jax: 0.10.0
libtpu: 0.0.40
codegen_flags: <defaults>
</compile_context>

<pallas_src>
import jax
import jax.numpy as jnp
from jax.experimental import pallas as pl
from jax.experimental.pallas import tpu as pltpu


def _round_up(n, m):
    return ((n + m - 1) // m) * m


def _tpu_limits():
    """(physical VMEM bytes, preferred MXU row tile).  Safe fallbacks."""
    vmem = 64 << 20          # conservative default (v7x per-TC VMEM)
    mxu_rows = 256           # v6e / v7x MXU height
    try:
        vmem = pltpu.get_tpu_info().vmem_capacity_bytes
    except Exception:
        pass
    try:
        kind = jax.devices()[0].device_kind.lower()
        if any(t in kind for t in ("v5 lite", "v5e", "v5lite", "v4", "v3", "v2")):
            mxu_rows = 128   # 4x128^2 MXU generations
    except Exception:
        pass
    return vmem, mxu_rows


def _esm_mean_kernel(x_ref, w1_ref, b1_ref, w2_ref, b2_ref, o_ref):
    # x_ref : [TB, Dp] f32/bf16   w1_ref: [Dp, Dp] bf16 ([in, out], pre-transposed)
    # b1_ref: [1, Dp]  f32        w2_ref: [1, Dp]  f32
    # b2_ref: [1]      f32 (SMEM scalar)            o_ref : [TB, 1] f32
    # Layer 1: bf16 MXU matmul with f32 accumulation.  The bf16 cast of x
    # happens on the VPU here (no wrapper-side HBM round trip).
    h = jnp.dot(x_ref[...].astype(jnp.bfloat16), w1_ref[...],
                preferred_element_type=jnp.float32)
    h = jnp.maximum(h + b1_ref[...], 0.0)
    # Layer 2 (out_features == 1): VPU multiply + lane reduction instead of a
    # degenerate single-column MXU matmul.
    out = jnp.sum(h * w2_ref[...], axis=-1, keepdims=True) + b2_ref[0]
    o_ref[...] = out.astype(o_ref.dtype)


def prepare_esm_mean_params(w1, b1, w2, b2):
    """One-time weight preprocessing (hoisted out of the per-call hot path).

    Transposes W1 to [D_in, D_out], zero-pads D to a lane-aligned multiple of
    128, and casts the MXU weight to bf16.  Zero padding is exact for this
    model (padded lanes contribute 0 through ReLU and w2).
    """
    w1 = jnp.asarray(w1, jnp.float32)
    D = w1.shape[0]
    Dp = _round_up(D, 128)
    pad = Dp - D
    w1_t = jnp.pad(w1.T, ((0, pad), (0, pad))).astype(jnp.bfloat16)
    b1_p = jnp.pad(jnp.asarray(b1, jnp.float32), (0, pad)).reshape(1, Dp)
    w2_p = jnp.pad(jnp.asarray(w2, jnp.float32).reshape(-1), (0, pad)).reshape(1, Dp)
    b2_p = jnp.asarray(b2, jnp.float32).reshape(1)
    return (w1_t, b1_p, w2_p, b2_p), D


def esm_attention1d_mean_prepared(x, params, d_embedding, *, max_batch_tile=1024):
    """x: [B, d_embedding] (f32 or bf16); params from prepare_esm_mean_params."""
    w1_t, b1_p, w2_p, b2_p = params
    Dp = w1_t.shape[0]
    B, D = x.shape
    assert D == d_embedding, (D, d_embedding)

    phys_vmem, mxu_rows = _tpu_limits()
    vmem_cap = phys_vmem - (8 << 20)    # leave headroom for compiler scratch

    # Keep x in its native dtype (bf16 callers pay 2 B/elem of HBM traffic,
    # f32 callers 4 B/elem with the cast done in-kernel under the MXU).
    x_dtype = jnp.bfloat16 if x.dtype == jnp.bfloat16 else jnp.float32
    x_bytes = jnp.dtype(x_dtype).itemsize

    def _budget(tb, n_wbuf):
        return (
            2 * tb * Dp * x_bytes      # x tile (double-buffered)
            + tb * Dp * 2              # in-kernel bf16 copy of the x tile
            + tb * Dp * 4              # f32 activation h
            + n_wbuf * Dp * Dp * 2     # w1 (bf16, resident)
            + n_wbuf * 2 * Dp * 4      # b1, w2 rows (f32)
            + 2 * tb * 128 * 4         # out tile (last dim pads to a lane tile)
        )

    # Batch tile: >=16 (bf16 sublane packing on the MXU LHS); for large B use
    # an MXU-height-aligned tile so the ~0.35us grid-step overhead amortizes.
    if B <= max_batch_tile:
        TB = _round_up(B, 16)
    else:
        TB = _round_up(max_batch_tile, mxu_rows)
    while TB > 16 and _budget(TB, 1) * 5 // 4 + (2 << 20) > vmem_cap:
        TB = max(16, TB // 2)          # shrink tile rather than overflow VMEM
    Bp = _round_up(B, TB)
    n_tiles = Bp // TB

    x_p = jnp.asarray(x, x_dtype)
    if Bp != B or Dp != D:
        x_p = jnp.pad(x_p, ((0, Bp - B), (0, Dp - D)))

    # Megacore split of the batch grid duplicates the resident-weight DMA per
    # core (v7x); only use it when x traffic clearly dominates weight traffic.
    parallel = n_tiles > 1 and Bp * x_bytes >= 2 * (Dp * 2)
    semantics = ("parallel",) if parallel else ("arbitrary",)

    cost = pl.CostEstimate(
        flops=2 * Bp * Dp * (Dp + 2),
        bytes_accessed=Bp * Dp * x_bytes + Dp * Dp * 2 + 2 * Dp * 4 + Bp * 4,
        transcendentals=0,
    )

    def run(single_buffer_weights):
        n_wbuf = 1 if single_buffer_weights else 2

        def wspec(shape):
            if single_buffer_weights:
                # Constant index_map -> double-buffering is pure VMEM waste.
                return pl.BlockSpec(shape, lambda i: (0, 0),
                                    pipeline_mode=pl.Buffered(1))
            return pl.BlockSpec(shape, lambda i: (0, 0))

        vmem_limit = int(min(max(_budget(TB, n_wbuf) * 5 // 4 + (2 << 20),
                                 32 << 20),
                             vmem_cap))

        return pl.pallas_call(
            _esm_mean_kernel,
            out_shape=jax.ShapeDtypeStruct((Bp, 1), jnp.float32),
            grid=(n_tiles,),
            in_specs=[
                pl.BlockSpec((TB, Dp), lambda i: (i, 0)),           # x: batch-tiled
                wspec((Dp, Dp)),                                    # w1: resident
                wspec((1, Dp)),                                     # b1: resident
                wspec((1, Dp)),                                     # w2: resident
                pl.BlockSpec(memory_space=pltpu.MemorySpace.SMEM),  # b2: scalar
            ],
            out_specs=pl.BlockSpec((TB, 1), lambda i: (i, 0)),
            compiler_params=pltpu.CompilerParams(
                dimension_semantics=semantics,
                vmem_limit_bytes=vmem_limit,
            ),
            cost_estimate=cost,
        )(x_p, w1_t, b1_p, w2_p, b2_p)

    try:
        out_p = run(True)       # single-buffered constant-index weights
    except Exception:
        out_p = run(False)      # fallback: default double buffering
    return out_p[:B]


def esm_attention1d_mean(x, w1, b1, w2, b2, *, max_batch_tile=1024):
    """Convenience one-shot wrapper.  For hot loops, call
    prepare_esm_mean_params once and reuse esm_attention1d_mean_prepared."""
    params, D = prepare_esm_mean_params(w1, b1, w2, b2)
    return esm_attention1d_mean_prepared(x, params, D, max_batch_tile=max_batch_tile)


def _reference(x, w1, b1, w2, b2):
    h = jnp.maximum(x @ w1.T + b1, 0.0)
    return h @ w2.T + b2


if __name__ == "__main__":
    key = jax.random.PRNGKey(0)
    B, D = 8, 32  # small shapes; D = d_embedding

    k_x, k_w1, k_b1, k_w2, k_b2 = jax.random.split(key, 5)
    x = jax.random.normal(k_x, (B, D), dtype=jnp.float32)
    # Deterministic synthetic parameters (PyTorch nn.Linear shapes).
    w1 = jax.random.normal(k_w1, (D, D), dtype=jnp.float32) * 0.1
    b1 = jax.random.normal(k_b1, (D,), dtype=jnp.float32) * 0.1
    w2 = jax.random.normal(k_w2, (1, D), dtype=jnp.float32) * 0.1
    b2 = jax.random.normal(k_b2, (1,), dtype=jnp.float32) * 0.1

    # One-time weight prep (hoisted out of the hot path), then the kernel.
    params, d_emb = prepare_esm_mean_params(w1, b1, w2, b2)
    out = esm_attention1d_mean_prepared(x, params, d_emb)
    out = jax.block_until_ready(out)

    ref = _reference(x, w1, b1, w2, b2)
    assert out.shape == (B, 1), out.shape
    # bf16 MXU operands with f32 accumulation: loosened tolerance vs the f32
    # PyTorch reference is a deliberate precision trade-off.
    err = jnp.max(jnp.abs(out - ref))
    assert jnp.allclose(out, ref, atol=2e-2, rtol=2e-2), ("mismatch", err)

    print("KERNEL_OK")
</pallas_src>

<mosaic_0001>
module attributes {stable_mosaic.version = 11 : i64} {
  func.func @_esm_mean_kernel(%arg0: i32, %arg1: memref<16x128xf32, #tpu.memory_space<vmem>>, %arg2: memref<128x128xbf16, #tpu.memory_space<vmem>>, %arg3: memref<1x128xf32, #tpu.memory_space<vmem>>, %arg4: memref<1x128xf32, #tpu.memory_space<vmem>>, %arg5: memref<1xf32, #tpu.memory_space<smem>>, %arg6: memref<16x1xf32, #tpu.memory_space<vmem>>) attributes {dimension_semantics = [#tpu.dimension_semantics<arbitrary>], iteration_bounds = array<i64: 1>, scalar_prefetch = 0 : i64, scratch_operands = 0 : i64, tpu.core_type = #tpu.core_type<tc>, window_params = [{transform_indices = @transform_0, window_bounds = array<i64: 16, 128>}, {pipeline_mode = #tpu.pipeline_mode<synchronous>, transform_indices = @transform_1, window_bounds = array<i64: 128, 128>}, {pipeline_mode = #tpu.pipeline_mode<synchronous>, transform_indices = @transform_2, window_bounds = array<i64: 1, 128>}, {pipeline_mode = #tpu.pipeline_mode<synchronous>, transform_indices = @transform_3, window_bounds = array<i64: 1, 128>}, {transform_indices = @transform_4, window_bounds = array<i64: 1>}, {transform_indices = @transform_5, window_bounds = array<i64: 16, 1>}]} {
    %c0 = arith.constant 0 : index
    %c0_0 = arith.constant 0 : index
    %0 = vector.load %arg1[%c0, %c0_0] : memref<16x128xf32, #tpu.memory_space<vmem>>, vector<16x128xf32>
    %1 = arith.truncf %0 : vector<16x128xf32> to vector<16x128xbf16>
    %c0_1 = arith.constant 0 : index
    %c0_2 = arith.constant 0 : index
    %2 = vector.load %arg2[%c0_1, %c0_2] : memref<128x128xbf16, #tpu.memory_space<vmem>>, vector<128x128xbf16>
    %cst = arith.constant dense<0.000000e+00> : vector<16x128xf32>
    %3 = tpu.matmul %1, %2, %cst {dimension_numbers = #tpu.dot_dimension_numbers<[1], [0], [0], [1], [0, 0, 1, 1], [], []>} : vector<16x128xbf16>, vector<128x128xbf16>, vector<16x128xf32> -> vector<16x128xf32>
    %c0_3 = arith.constant 0 : index
    %c0_4 = arith.constant 0 : index
    %4 = vector.load %arg3[%c0_3, %c0_4] : memref<1x128xf32, #tpu.memory_space<vmem>>, vector<1x128xf32>
    %5 = vector.broadcast %4 : vector<1x128xf32> to vector<16x128xf32>
    %6 = arith.addf %3, %5 : vector<16x128xf32>
    %cst_5 = arith.constant 0.000000e+00 : f32
    %7 = vector.broadcast %cst_5 : f32 to vector<16x128xf32>
    %8 = arith.maximumf %6, %7 : vector<16x128xf32>
    %c0_6 = arith.constant 0 : index
    %c0_7 = arith.constant 0 : index
    %9 = vector.load %arg4[%c0_6, %c0_7] : memref<1x128xf32, #tpu.memory_space<vmem>>, vector<1x128xf32>
    %10 = vector.broadcast %9 : vector<1x128xf32> to vector<16x128xf32>
    %11 = arith.mulf %8, %10 : vector<16x128xf32>
    %cst_8 = arith.constant dense<0.000000e+00> : vector<16xf32>
    %12 = vector.multi_reduction <add>, %11, %cst_8 [1] : vector<16x128xf32> to vector<16xf32>
    %13 = vector.shape_cast %12 : vector<16xf32> to vector<16x1xf32>
    %c0_9 = arith.constant 0 : index
    %14 = memref.load %arg5[%c0_9] : memref<1xf32, #tpu.memory_space<smem>>
    %15 = vector.broadcast %14 : f32 to vector<16x1xf32>
    %16 = arith.addf %13, %15 : vector<16x1xf32>
    %c0_10 = arith.constant 0 : index
    %c0_11 = arith.constant 0 : index
    %17 = vector.load %arg6[%c0_10, %c0_11] : memref<16x1xf32, #tpu.memory_space<vmem>>, vector<16x1xf32>
    tpu.vector_store %arg6[%c0_10, %c0_11], %16 {strides = array<i32>} : memref<16x1xf32, #tpu.memory_space<vmem>>, vector<16x1xf32>,
    return
  }
  func.func @transform_0(%arg0: i32) -> (i32, i32) {
    %c0_i32 = arith.constant 0 : i32
    %c0_i32_0 = arith.constant 0 : i32
    return %arg0, %c0_i32 : i32, i32
  }
  func.func @transform_1(%arg0: i32) -> (i32, i32) {
    %c0_i32 = arith.constant 0 : i32
    %c0_i32_0 = arith.constant 0 : i32
    %c0_i32_1 = arith.constant 0 : i32
    return %c0_i32, %c0_i32_0 : i32, i32
  }
  func.func @transform_2(%arg0: i32) -> (i32, i32) {
    %c0_i32 = arith.constant 0 : i32
    %c0_i32_0 = arith.constant 0 : i32
    %c0_i32_1 = arith.constant 0 : i32
    return %c0_i32, %c0_i32_0 : i32, i32
  }
  func.func @transform_3(%arg0: i32) -> (i32, i32) {
    %c0_i32 = arith.constant 0 : i32
    %c0_i32_0 = arith.constant 0 : i32
    %c0_i32_1 = arith.constant 0 : i32
    return %c0_i32, %c0_i32_0 : i32, i32
  }
  func.func @transform_4(%arg0: i32) -> i32 {
    %c0_i32 = arith.constant 0 : i32
    %c0_i32_0 = arith.constant 0 : i32
    return %c0_i32 : i32
  }
  func.func @transform_5(%arg0: i32) -> (i32, i32) {
    %c0_i32 = arith.constant 0 : i32
    %c0_i32_0 = arith.constant 0 : i32
    return %arg0, %c0_i32 : i32, i32
  }
}

module attributes {stable_mosaic.version = 11 : i64} {
  func.func @_esm_mean_kernel(%arg0: i32, %arg1: memref<16x128xf32, #tpu.memory_space<vmem>>, %arg2: memref<128x128xbf16, #tpu.memory_space<vmem>>, %arg3: memref<1x128xf32, #tpu.memory_space<vmem>>, %arg4: memref<1x128xf32, #tpu.memory_space<vmem>>, %arg5: memref<1xf32, #tpu.memory_space<smem>>, %arg6: memref<16x1xf32, #tpu.memory_space<vmem>>) attributes {dimension_semantics = [#tpu.dimension_semantics<arbitrary>], iteration_bounds = array<i64: 1>, scalar_prefetch = 0 : i64, scratch_operands = 0 : i64, tpu.core_type = #tpu.core_type<tc>, window_params = [{transform_indices = @transform_0, window_bounds = array<i64: 16, 128>}, {pipeline_mode = #tpu.pipeline_mode<synchronous>, transform_indices = @transform_1, window_bounds = array<i64: 128, 128>}, {pipeline_mode = #tpu.pipeline_mode<synchronous>, transform_indices = @transform_2, window_bounds = array<i64: 1, 128>}, {pipeline_mode = #tpu.pipeline_mode<synchronous>, transform_indices = @transform_3, window_bounds = array<i64: 1, 128>}, {transform_indices = @transform_4, window_bounds = array<i64: 1>}, {transform_indices = @transform_5, window_bounds = array<i64: 16, 1>}]} {
    %c0 = arith.constant 0 : index
    %c0_0 = arith.constant 0 : index
    %0 = vector.load %arg1[%c0, %c0_0] : memref<16x128xf32, #tpu.memory_space<vmem>>, vector<16x128xf32>
    %1 = arith.truncf %0 : vector<16x128xf32> to vector<16x128xbf16>
    %c0_1 = arith.constant 0 : index
    %c0_2 = arith.constant 0 : index
    %2 = vector.load %arg2[%c0_1, %c0_2] : memref<128x128xbf16, #tpu.memory_space<vmem>>, vector<128x128xbf16>
    %cst = arith.constant dense<0.000000e+00> : vector<16x128xf32>
    %3 = tpu.matmul %1, %2, %cst {dimension_numbers = #tpu.dot_dimension_numbers<[1], [0], [0], [1], [0, 0, 1, 1], [], []>} : vector<16x128xbf16>, vector<128x128xbf16>, vector<16x128xf32> -> vector<16x128xf32>
    %c0_3 = arith.constant 0 : index
    %c0_4 = arith.constant 0 : index
    %4 = vector.load %arg3[%c0_3, %c0_4] : memref<1x128xf32, #tpu.memory_space<vmem>>, vector<1x128xf32>
    %5 = vector.broadcast %4 : vector<1x128xf32> to vector<16x128xf32>
    %6 = arith.addf %3, %5 : vector<16x128xf32>
    %cst_5 = arith.constant 0.000000e+00 : f32
    %7 = vector.broadcast %cst_5 : f32 to vector<16x128xf32>
    %8 = arith.maximumf %6, %7 : vector<16x128xf32>
    %c0_6 = arith.constant 0 : index
    %c0_7 = arith.constant 0 : index
    %9 = vector.load %arg4[%c0_6, %c0_7] : memref<1x128xf32, #tpu.memory_space<vmem>>, vector<1x128xf32>
    %10 = vector.broadcast %9 : vector<1x128xf32> to vector<16x128xf32>
    %11 = arith.mulf %8, %10 : vector<16x128xf32>
    %cst_8 = arith.constant dense<0.000000e+00> : vector<16xf32>
    %12 = vector.multi_reduction <add>, %11, %cst_8 [1] : vector<16x128xf32> to vector<16xf32>
    %13 = vector.shape_cast %12 : vector<16xf32> to vector<16x1xf32>
    %c0_9 = arith.constant 0 : index
    %14 = memref.load %arg5[%c0_9] : memref<1xf32, #tpu.memory_space<smem>>
    %15 = vector.broadcast %14 : f32 to vector<16x1xf32>
    %16 = arith.addf %13, %15 : vector<16x1xf32>
    %c0_10 = arith.constant 0 : index
    %c0_11 = arith.constant 0 : index
    %17 = vector.load %arg6[%c0_10, %c0_11] : memref<16x1xf32, #tpu.memory_space<vmem>>, vector<16x1xf32>
    tpu.vector_store %arg6[%c0_10, %c0_11], %16 {strides = array<i32>} : memref<16x1xf32, #tpu.memory_space<vmem>>, vector<16x1xf32>,
    return
  }
  func.func @transform_0(%arg0: i32) -> (i32, i32) {
    %c0_i32 = arith.constant 0 : i32
    %c0_i32_0 = arith.constant 0 : i32
    return %arg0, %c0_i32 : i32, i32
  }
  func.func @transform_1(%arg0: i32) -> (i32, i32) {
    %c0_i32 = arith.constant 0 : i32
    %c0_i32_0 = arith.constant 0 : i32
    %c0_i32_1 = arith.constant 0 : i32
    return %c0_i32, %c0_i32_0 : i32, i32
  }
  func.func @transform_2(%arg0: i32) -> (i32, i32) {
    %c0_i32 = arith.constant 0 : i32
    %c0_i32_0 = arith.constant 0 : i32
    %c0_i32_1 = arith.constant 0 : i32
    return %c0_i32, %c0_i32_0 : i32, i32
  }
  func.func @transform_3(%arg0: i32) -> (i32, i32) {
    %c0_i32 = arith.constant 0 : i32
    %c0_i32_0 = arith.constant 0 : i32
    %c0_i32_1 = arith.constant 0 : i32
    return %c0_i32, %c0_i32_0 : i32, i32
  }
  func.func @transform_4(%arg0: i32) -> i32 {
    %c0_i32 = arith.constant 0 : i32
    %c0_i32_0 = arith.constant 0 : i32
    return %c0_i32 : i32
  }
  func.func @transform_5(%arg0: i32) -> (i32, i32) {
    %c0_i32 = arith.constant 0 : i32
    %c0_i32_0 = arith.constant 0 : i32
    return %arg0, %c0_i32 : i32, i32
  }
}

</mosaic_0001>

<llo_original>
// kernel: tpu_custom_call.1
$region0: #{tpu_custom_call.1}
  #allocation0 [shape = 'u32[]', space=smem, size = 0x4, offset = 0x4, fixed_abs, tag = 'smem constant byte address 0x4 - core index']
  #allocation1 [shape = 'u32[144,128]{1,0:T(1,128)}', space=vmem, size = 0x12000, scoped, tag = 'internal scratch']
  #allocation2 [shape = 'f32[1]{0:T(128)S(6)}', space=smem, size = 0x200, scoped, tag = 'scoped memory for tpu_custom_call.1']
  %s0 = inlined_call_operand.hbm [shape: f32[16,128], index: 0, kind: input, shape index: {}]
  %s1 = inlined_call_operand.hbm [shape: bf16[128,128], index: 1, kind: input, shape index: {}]
  %s2 = inlined_call_operand.vmem [shape: f32[1,128], index: 2, kind: input, shape index: {}]
  %s3 = inlined_call_operand.vmem [shape: f32[1,128], index: 3, kind: input, shape index: {}]
  %s4 = inlined_call_operand.<no memory space> [shape: f32[1], index: 4, kind: input, shape index: {}]
  %s5 = inlined_call_operand.vmem [shape: f32[16,1], index: 5, kind: output, shape index: {}]
  %s6 = sld [smem:[#allocation0]]
  $region38: #{tpu_custom_call.1} parent=0
    _
  %s8 = ssub.s32 1, %s6
  %s9 = scalar_select 0, %s8, %s6
  %10 = sst [smem:[#allocation2]] %s4
  $region1: #{tpu_custom_call.1} parent=0
    #allocation3 [shape = 'u8[8192]{0}', space=vmem, size = 0x2000, scoped, tag = 'input window, operand 0, single buffered']
    #allocation4 [shape = 's32[1]{0}', space=sflag, size = 0x4, scoped, tag = 'scoped memory for tpu_custom_call.1']
    #allocation5 [shape = 'u8[32768]{0}', space=vmem, size = 0x8000, scoped, tag = 'input window, operand 1, single buffered']
    #allocation6 [shape = 's32[1]{0}', space=sflag, size = 0x4, scoped, tag = 'scoped memory for tpu_custom_call.1']
    %11 = vsyncpa [#allocation4], 0
    %12 = vsyncpa [#allocation6], 0
    // Predicated region
    $region2: #{tpu_custom_call.1} parent=1 // pred_check
      _
    $region3: #{tpu_custom_call.1} parent=1 // pred_check_branch
      %14 = sbr.rel (0) target = $region5
    $region4: #{tpu_custom_call.1} parent=1 // pred_region
      %s16 = ssub.s32 256, 256
      %17 = vsyncadd [#allocation4], %s16
      %s18 = sshll.u32 [#allocation3], 4
      %s19 = int_to_ptr.vmem [resolvable:$true] %s18
      %24 = dma.hbm_to_vmem [thread:$0]  %s0, 256, %s19, [#allocation4], 128, 128, 8
    $region5: #{tpu_custom_call.1} parent=1 // pred_fallthru
      _
    // Predicated region
    $region6: #{tpu_custom_call.1} parent=1 // pred_check
      _
    $region7: #{tpu_custom_call.1} parent=1 // pred_check_branch
      %26 = sbr.rel (0) target = $region9
    $region8: #{tpu_custom_call.1} parent=1 // pred_region
      %s28 = ssub.s32 1024, 1024
      %29 = vsyncadd [#allocation6], %s28
      %s30 = sshll.u32 [#allocation5], 4
      %s31 = int_to_ptr.vmem [resolvable:$true] %s30
      %36 = dma.hbm_to_vmem [thread:$0]  %s1, 1024, %s31, [#allocation6], 64, 64, 4
    $region9: #{tpu_custom_call.1} parent=1 // pred_fallthru
      _
    // Predicated region
    $region10: #{tpu_custom_call.1} parent=1 // pred_check
      _
    $region11: #{tpu_custom_call.1} parent=1 // pred_check_branch
      %38 = sbr.rel (0) target = $region13
    $region12: #{tpu_custom_call.1} parent=1 // pred_region
      _
    $region13: #{tpu_custom_call.1} parent=1 // pred_fallthru
      _
    // Predicated region
    $region14: #{tpu_custom_call.1} parent=1 // pred_check
      _
    $region15: #{tpu_custom_call.1} parent=1 // pred_check_branch
      %40 = sbr.rel (0) target = $region17
    $region16: #{tpu_custom_call.1} parent=1 // pred_region
      _
    $region17: #{tpu_custom_call.1} parent=1 // pred_fallthru
      _
    // Predicated region
    $region18: #{tpu_custom_call.1} parent=1 // pred_check
      _
    $region19: #{tpu_custom_call.1} parent=1 // pred_check_branch
      %42 = sbr.rel (0) target = $region21
    $region20: #{tpu_custom_call.1} parent=1 // pred_region
      _
    $region21: #{tpu_custom_call.1} parent=1 // pred_fallthru
      _
    // Predicated region
    $region22: #{tpu_custom_call.1} parent=1 // pred_check
      _
    $region23: #{tpu_custom_call.1} parent=1 // pred_check_branch
      %44 = sbr.rel (0) target = $region25
    $region24: #{tpu_custom_call.1} parent=1 // pred_region
      %45 = dma.done [#allocation4], 256
    $region25: #{tpu_custom_call.1} parent=1 // pred_fallthru
      _
    // Predicated region
    $region26: #{tpu_custom_call.1} parent=1 // pred_check
      _
    $region27: #{tpu_custom_call.1} parent=1 // pred_check_branch
      %47 = sbr.rel (0) target = $region29
    $region28: #{tpu_custom_call.1} parent=1 // pred_region
      %48 = dma.done [#allocation6], 1024
    $region29: #{tpu_custom_call.1} parent=1 // pred_fallthru
      _
    %v50 = vld [vmem:[#allocation3] sm:$0xff]
    %v51 = vld [vmem:[#allocation3 + $0x8] sm:$0xff]
    %v52 = vpack.c.bf16 %v51, %v50
    %v53 = vld [vmem:[#allocation5] sm:$0xf]
    %v54 = vld [vmem:[#allocation5 + $0x4] sm:$0xf]
    %v55 = vld [vmem:[#allocation5 + $0x8] sm:$0xf]
    %v56 = vld [vmem:[#allocation5 + $0xc] sm:$0xf]
    %v57 = vld [vmem:[#allocation5 + $0x10] sm:$0xf]
    %v58 = vld [vmem:[#allocation5 + $0x14] sm:$0xf]
    %v59 = vld [vmem:[#allocation5 + $0x18] sm:$0xf]
    %v60 = vld [vmem:[#allocation5 + $0x1c] sm:$0xf]
    %v61 = vld [vmem:[#allocation5 + $0x20] sm:$0xf]
    %v62 = vld [vmem:[#allocation5 + $0x24] sm:$0xf]
    %v63 = vld [vmem:[#allocation5 + $0x28] sm:$0xf]
    %v64 = vld [vmem:[#allocation5 + $0x2c] sm:$0xf]
    %v65 = vld [vmem:[#allocation5 + $0x30] sm:$0xf]
    %v66 = vld [vmem:[#allocation5 + $0x34] sm:$0xf]
    %v67 = vld [vmem:[#allocation5 + $0x38] sm:$0xf]
    %v68 = vld [vmem:[#allocation5 + $0x3c] sm:$0xf]
    %v69 = vld [vmem:[%s2] sm:$0x1]
    %v71 = vlaneseq
    %v72 = vshrl.u32 %v71, 7
    %v73 = vsub.s32 0, %v72
    %v74 = vrot.slane %v69, %v73
    %v92 = vunpack.c.l.b16 %v53
    %v93 = vunpack.c.l.b16 %v54
    %v94 = vunpack.c.l.b16 %v55
    %v95 = vunpack.c.l.b16 %v56
    %v96 = vunpack.c.l.b16 %v57
    %v97 = vunpack.c.l.b16 %v58
    %v98 = vunpack.c.l.b16 %v59
    %v99 = vunpack.c.l.b16 %v60
    %v100 = vunpack.c.l.b16 %v61
    %v101 = vunpack.c.l.b16 %v62
    %v102 = vunpack.c.l.b16 %v63
    %v103 = vunpack.c.l.b16 %v64
    %v104 = vunpack.c.l.b16 %v65
    %v105 = vunpack.c.l.b16 %v66
    %v106 = vunpack.c.l.b16 %v67
    %v107 = vunpack.c.l.b16 %v68
    %v108 = vpack.c.b16 %v93, %v92
    %v109 = vpack.c.b16 %v95, %v94
    %v110 = vpack.c.b16 %v97, %v96
    %v111 = vpack.c.b16 %v99, %v98
    %v112 = vpack.c.b16 %v101, %v100
    %v113 = vpack.c.b16 %v103, %v102
    %v114 = vpack.c.b16 %v105, %v104
    %v115 = vpack.c.b16 %v107, %v106
    %124 = vmatprep.subr.bf16.mxu0 0
    %125 = vmatpush1.bf16.msra.mxu0 %v115
    %126 = vmatprep.subr.bf16.mxu0 0
    %127 = vmatpush1.bf16.msra.mxu0 %v114
    %128 = vmatprep.subr.bf16.mxu0 0
    %129 = vmatpush1.bf16.msra.mxu0 %v113
    %130 = vmatprep.subr.bf16.mxu0 0
    %131 = vmatpush1.bf16.msra.mxu0 %v112
    %132 = vmatprep.subr.bf16.mxu0 0
    %133 = vmatpush1.bf16.msra.mxu0 %v111
    %134 = vmatprep.subr.bf16.mxu0 0
    %135 = vmatpush1.bf16.msra.mxu0 %v110
    %136 = vmatprep.subr.bf16.mxu0 0
    %137 = vmatpush1.bf16.msra.mxu0 %v109
    %138 = vmatprep.subr.bf16.mxu0 0
    %139 = vmatpush1.bf16.msra.mxu0 %v108
    %140 = vmatprep.subr.bf16.mxu0 0
    %141 = vmatpush2.bf16.msra.mxu0 0
    %142 = vmatprep.subr.bf16.mxu0 0
    %143 = vmatpush2.bf16.msra.mxu0 0
    %144 = vmatprep.subr.bf16.mxu0 0
    %145 = vmatpush2.bf16.msra.mxu0 0
    %146 = vmatprep.subr.bf16.mxu0 0
    %147 = vmatpush2.bf16.msra.mxu0 0
    %148 = vmatprep.subr.bf16.mxu0 0
    %149 = vmatpush2.bf16.msra.mxu0 0
    %150 = vmatprep.subr.bf16.mxu0 0
    %151 = vmatpush2.bf16.msra.mxu0 0
    %152 = vmatprep.subr.bf16.mxu0 0
    %153 = vmatpush2.bf16.msra.mxu0 0
    %154 = vmatprep.subr.bf16.mxu0 0
    %155 = vmatpush2.bf16.msra.mxu0 0
    %156 = vmatprep.mubr.bf16.mxu0 0
    %157 = vmatmul.mubr.bf16.gmra.mxu0 %v52
    %v158 = vpop.f32.mrf.mxu0
    %v159 = vadd.f32 %v74, %v158
    %v160 = vpop.f32.mrf.mxu0
    %v161 = vpop.f32.mrf.mxu0
    %v162 = vadd.f32 %v74, %v161
    %v163 = vpop.f32.mrf.mxu0
    %164 = vdwg.mxu0
    %v165 = vmax.f32 %v159, 0.0
    %v166 = vmax.f32 %v162, 0.0
    %v167 = vld [vmem:[%s3] sm:$0x1]
    %v169 = vlaneseq
    %v170 = vshrl.u32 %v169, 7
    %v171 = vsub.s32 0, %v170
    %v172 = vrot.slane %v167, %v171
    %v174 = vmul.f32 %v165, %v172
    %v175 = vmul.f32 %v166, %v172
    %176 = vadd.xlane.f32.xlu0 %v174
    %v177 = vpop.xlane.xlu0 %176
    %178 = vadd.xlane.f32.xlu0 %v175
    %v179 = vpop.xlane.xlu0 %178
    %s180 = sld [smem:[#allocation2]]
    %v181 = vstv %s180
    %v182 = vadd.f32 %v177, %v181
    %v183 = vadd.f32 %v179, %v181
    %vm184 = vcmask 7168
    %185 = vst.msk [vmem:[%s5] sm:$0xff] %vm184, %v182
    %186 = vst.msk [vmem:[%s5 + $0x8] sm:$0xff] %vm184, %v183
    // Predicated region
    $region30: #{tpu_custom_call.1} parent=1 // pred_check
      _
    $region31: #{tpu_custom_call.1} parent=1 // pred_check_branch
      %188 = sbr.rel (0) target = $region33
    $region32: #{tpu_custom_call.1} parent=1 // pred_region
      _
    $region33: #{tpu_custom_call.1} parent=1 // pred_fallthru
      _
    // Predicated region
    $region34: #{tpu_custom_call.1} parent=1 // pred_check
      _
    $region35: #{tpu_custom_call.1} parent=1 // pred_check_branch
      %190 = sbr.rel (0) target = $region37
    $region36: #{tpu_custom_call.1} parent=1 // pred_region
      _
    $region37: #{tpu_custom_call.1} parent=1 // pred_fallthru
      _
    %191 = vsyncpa [#allocation4], 1
    %192 = vsyncpa [#allocation6], 1

// kernel: tpu_custom_call.1
$region0: #{tpu_custom_call.1}
  #allocation0 [shape = 'u32[]', space=smem, size = 0x4, offset = 0x4, fixed_abs, tag = 'smem constant byte address 0x4 - core index']
  #allocation1 [shape = 'u32[144,128]{1,0:T(1,128)}', space=vmem, size = 0x12000, scoped, tag = 'internal scratch']
  #allocation2 [shape = 'f32[1]{0:T(128)S(6)}', space=smem, size = 0x200, scoped, tag = 'scoped memory for tpu_custom_call.1']
  %s0 = inlined_call_operand.hbm [shape: f32[16,128], index: 0, kind: input, shape index: {}]
  %s1 = inlined_call_operand.hbm [shape: bf16[128,128], index: 1, kind: input, shape index: {}]
  %s2 = inlined_call_operand.vmem [shape: f32[1,128], index: 2, kind: input, shape index: {}]
  %s3 = inlined_call_operand.vmem [shape: f32[1,128], index: 3, kind: input, shape index: {}]
  %s4 = inlined_call_operand.<no memory space> [shape: f32[1], index: 4, kind: input, shape index: {}]
  %s5 = inlined_call_operand.vmem [shape: f32[16,1], index: 5, kind: output, shape index: {}]
  %s6 = sld [smem:[#allocation0]]
  $region38: #{tpu_custom_call.1} parent=0
    _
  %s8 = ssub.s32 1, %s6
  %s9 = scalar_select 0, %s8, %s6
  %10 = sst [smem:[#allocation2]] %s4
  $region1: #{tpu_custom_call.1} parent=0
    #allocation3 [shape = 'u8[8192]{0}', space=vmem, size = 0x2000, scoped, tag = 'input window, operand 0, single buffered']
    #allocation4 [shape = 's32[1]{0}', space=sflag, size = 0x4, scoped, tag = 'scoped memory for tpu_custom_call.1']
    #allocation5 [shape = 'u8[32768]{0}', space=vmem, size = 0x8000, scoped, tag = 'input window, operand 1, single buffered']
    #allocation6 [shape = 's32[1]{0}', space=sflag, size = 0x4, scoped, tag = 'scoped memory for tpu_custom_call.1']
    %11 = vsyncpa [#allocation4], 0
    %12 = vsyncpa [#allocation6], 0
    // Predicated region
    $region2: #{tpu_custom_call.1} parent=1 // pred_check
      _
    $region3: #{tpu_custom_call.1} parent=1 // pred_check_branch
      %14 = sbr.rel (0) target = $region5
    $region4: #{tpu_custom_call.1} parent=1 // pred_region
      %s16 = ssub.s32 256, 256
      %17 = vsyncadd [#allocation4], %s16
      %s18 = sshll.u32 [#allocation3], 4
      %s19 = int_to_ptr.vmem [resolvable:$true] %s18
      %24 = dma.hbm_to_vmem [thread:$0]  %s0, 256, %s19, [#allocation4], 128, 128, 8
    $region5: #{tpu_custom_call.1} parent=1 // pred_fallthru
      _
    // Predicated region
    $region6: #{tpu_custom_call.1} parent=1 // pred_check
      _
    $region7: #{tpu_custom_call.1} parent=1 // pred_check_branch
      %26 = sbr.rel (0) target = $region9
    $region8: #{tpu_custom_call.1} parent=1 // pred_region
      %s28 = ssub.s32 1024, 1024
      %29 = vsyncadd [#allocation6], %s28
      %s30 = sshll.u32 [#allocation5], 4
      %s31 = int_to_ptr.vmem [resolvable:$true] %s30
      %36 = dma.hbm_to_vmem [thread:$0]  %s1, 1024, %s31, [#allocation6], 64, 64, 4
    $region9: #{tpu_custom_call.1} parent=1 // pred_fallthru
      _
    // Predicated region
    $region10: #{tpu_custom_call.1} parent=1 // pred_check
      _
    $region11: #{tpu_custom_call.1} parent=1 // pred_check_branch
      %38 = sbr.rel (0) target = $region13
    $region12: #{tpu_custom_call.1} parent=1 // pred_region
      _
    $region13: #{tpu_custom_call.1} parent=1 // pred_fallthru
      _
    // Predicated region
    $region14: #{tpu_custom_call.1} parent=1 // pred_check
      _
    $region15: #{tpu_custom_call.1} parent=1 // pred_check_branch
      %40 = sbr.rel (0) target = $region17
    $region16: #{tpu_custom_call.1} parent=1 // pred_region
      _
    $region17: #{tpu_custom_call.1} parent=1 // pred_fallthru
      _
    // Predicated region
    $region18: #{tpu_custom_call.1} parent=1 // pred_check
      _
    $region19: #{tpu_custom_call.1} parent=1 // pred_check_branch
      %42 = sbr.rel (0) target = $region21
    $region20: #{tpu_custom_call.1} parent=1 // pred_region
      _
    $region21: #{tpu_custom_call.1} parent=1 // pred_fallthru
      _
    // Predicated region
    $region22: #{tpu_custom_call.1} parent=1 // pred_check
      _
    $region23: #{tpu_custom_call.1} parent=1 // pred_check_branch
      %44 = sbr.rel (0) target = $region25
    $region24: #{tpu_custom_call.1} parent=1 // pred_region
      %45 = dma.done [#allocation4], 256
    $region25: #{tpu_custom_call.1} parent=1 // pred_fallthru
      _
    // Predicated region
    $region26: #{tpu_custom_call.1} parent=1 // pred_check
      _
    $region27: #{tpu_custom_call.1} parent=1 // pred_check_branch
      %47 = sbr.rel (0) target = $region29
    $region28: #{tpu_custom_call.1} parent=1 // pred_region
      %48 = dma.done [#allocation6], 1024
    $region29: #{tpu_custom_call.1} parent=1 // pred_fallthru
      _
    %v50 = vld [vmem:[#allocation3] sm:$0xff]
    %v51 = vld [vmem:[#allocation3 + $0x8] sm:$0xff]
    %v52 = vpack.c.bf16 %v51, %v50
    %v53 = vld [vmem:[#allocation5] sm:$0xf]
    %v54 = vld [vmem:[#allocation5 + $0x4] sm:$0xf]
    %v55 = vld [vmem:[#allocation5 + $0x8] sm:$0xf]
    %v56 = vld [vmem:[#allocation5 + $0xc] sm:$0xf]
    %v57 = vld [vmem:[#allocation5 + $0x10] sm:$0xf]
    %v58 = vld [vmem:[#allocation5 + $0x14] sm:$0xf]
    %v59 = vld [vmem:[#allocation5 + $0x18] sm:$0xf]
    %v60 = vld [vmem:[#allocation5 + $0x1c] sm:$0xf]
    %v61 = vld [vmem:[#allocation5 + $0x20] sm:$0xf]
    %v62 = vld [vmem:[#allocation5 + $0x24] sm:$0xf]
    %v63 = vld [vmem:[#allocation5 + $0x28] sm:$0xf]
    %v64 = vld [vmem:[#allocation5 + $0x2c] sm:$0xf]
    %v65 = vld [vmem:[#allocation5 + $0x30] sm:$0xf]
    %v66 = vld [vmem:[#allocation5 + $0x34] sm:$0xf]
    %v67 = vld [vmem:[#allocation5 + $0x38] sm:$0xf]
    %v68 = vld [vmem:[#allocation5 + $0x3c] sm:$0xf]
    %v69 = vld [vmem:[%s2] sm:$0x1]
    %v71 = vlaneseq
    %v72 = vshrl.u32 %v71, 7
    %v73 = vsub.s32 0, %v72
    %v74 = vrot.slane %v69, %v73
    %v92 = vunpack.c.l.b16 %v53
    %v93 = vunpack.c.l.b16 %v54
    %v94 = vunpack.c.l.b16 %v55
    %v95 = vunpack.c.l.b16 %v56
    %v96 = vunpack.c.l.b16 %v57
    %v97 = vunpack.c.l.b16 %v58
    %v98 = vunpack.c.l.b16 %v59
    %v99 = vunpack.c.l.b16 %v60
    %v100 = vunpack.c.l.b16 %v61
    %v101 = vunpack.c.l.b16 %v62
    %v102 = vunpack.c.l.b16 %v63
    %v103 = vunpack.c.l.b16 %v64
    %v104 = vunpack.c.l.b16 %v65
    %v105 = vunpack.c.l.b16 %v66
    %v106 = vunpack.c.l.b16 %v67
    %v107 = vunpack.c.l.b16 %v68
    %v108 = vpack.c.b16 %v93, %v92
    %v109 = vpack.c.b16 %v95, %v94
    %v110 = vpack.c.b16 %v97, %v96
    %v111 = vpack.c.b16 %v99, %v98
    %v112 = vpack.c.b16 %v101, %v100
    %v113 = vpack.c.b16 %v103, %v102
    %v114 = vpack.c.b16 %v105, %v104
    %v115 = vpack.c.b16 %v107, %v106
    %124 = vmatprep.subr.bf16.mxu0 0
    %125 = vmatpush1.bf16.msra.mxu0 %v115
    %126 = vmatprep.subr.bf16.mxu0 0
    %127 = vmatpush1.bf16.msra.mxu0 %v114
    %128 = vmatprep.subr.bf16.mxu0 0
    %129 = vmatpush1.bf16.msra.mxu0 %v113
    %130 = vmatprep.subr.bf16.mxu0 0
    %131 = vmatpush1.bf16.msra.mxu0 %v112
    %132 = vmatprep.subr.bf16.mxu0 0
    %133 = vmatpush1.bf16.msra.mxu0 %v111
    %134 = vmatprep.subr.bf16.mxu0 0
    %135 = vmatpush1.bf16.msra.mxu0 %v110
    %136 = vmatprep.subr.bf16.mxu0 0
    %137 = vmatpush1.bf16.msra.mxu0 %v109
    %138 = vmatprep.subr.bf16.mxu0 0
    %139 = vmatpush1.bf16.msra.mxu0 %v108
    %140 = vmatprep.subr.bf16.mxu0 0
    %141 = vmatpush2.bf16.msra.mxu0 0
    %142 = vmatprep.subr.bf16.mxu0 0
    %143 = vmatpush2.bf16.msra.mxu0 0
    %144 = vmatprep.subr.bf16.mxu0 0
    %145 = vmatpush2.bf16.msra.mxu0 0
    %146 = vmatprep.subr.bf16.mxu0 0
    %147 = vmatpush2.bf16.msra.mxu0 0
    %148 = vmatprep.subr.bf16.mxu0 0
    %149 = vmatpush2.bf16.msra.mxu0 0
    %150 = vmatprep.subr.bf16.mxu0 0
    %151 = vmatpush2.bf16.msra.mxu0 0
    %152 = vmatprep.subr.bf16.mxu0 0
    %153 = vmatpush2.bf16.msra.mxu0 0
    %154 = vmatprep.subr.bf16.mxu0 0
    %155 = vmatpush2.bf16.msra.mxu0 0
    %156 = vmatprep.mubr.bf16.mxu0 0
    %157 = vmatmul.mubr.bf16.gmra.mxu0 %v52
    %v158 = vpop.f32.mrf.mxu0
    %v159 = vadd.f32 %v74, %v158
    %v160 = vpop.f32.mrf.mxu0
    %v161 = vpop.f32.mrf.mxu0
    %v162 = vadd.f32 %v74, %v161
    %v163 = vpop.f32.mrf.mxu0
    %164 = vdwg.mxu0
    %v165 = vmax.f32 %v159, 0.0
    %v166 = vmax.f32 %v162, 0.0
    %v167 = vld [vmem:[%s3] sm:$0x1]
    %v169 = vlaneseq
    %v170 = vshrl.u32 %v169, 7
    %v171 = vsub.s32 0, %v170
    %v172 = vrot.slane %v167, %v171
    %v174 = vmul.f32 %v165, %v172
    %v175 = vmul.f32 %v166, %v172
    %176 = vadd.xlane.f32.xlu0 %v174
    %v177 = vpop.xlane.xlu0 %176
    %178 = vadd.xlane.f32.xlu0 %v175
    %v179 = vpop.xlane.xlu0 %178
    %s180 = sld [smem:[#allocation2]]
    %v181 = vstv %s180
    %v182 = vadd.f32 %v177, %v181
    %v183 = vadd.f32 %v179, %v181
    %vm184 = vcmask 7168
    %185 = vst.msk [vmem:[%s5] sm:$0xff] %vm184, %v182
    %186 = vst.msk [vmem:[%s5 + $0x8] sm:$0xff] %vm184, %v183
    // Predicated region
    $region30: #{tpu_custom_call.1} parent=1 // pred_check
      _
    $region31: #{tpu_custom_call.1} parent=1 // pred_check_branch
      %188 = sbr.rel (0) target = $region33
    $region32: #{tpu_custom_call.1} parent=1 // pred_region
      _
    $region33: #{tpu_custom_call.1} parent=1 // pred_fallthru
      _
    // Predicated region
    $region34: #{tpu_custom_call.1} parent=1 // pred_check
      _
    $region35: #{tpu_custom_call.1} parent=1 // pred_check_branch
      %190 = sbr.rel (0) target = $region37
    $region36: #{tpu_custom_call.1} parent=1 // pred_region
      _
    $region37: #{tpu_custom_call.1} parent=1 // pred_fallthru
      _
    %191 = vsyncpa [#allocation4], 1
    %192 = vsyncpa [#allocation6], 1

</llo_original>
